<compile_context>
chip_gen: v5e
topology: v5e:2x2
jax: 0.10.0
libtpu: 0.0.40
codegen_flags: <defaults>
</compile_context>

<pallas_src>
import functools

import jax
import jax.numpy as jnp
from jax import lax
from jax.experimental import pallas as pl
from jax.experimental.pallas import tpu as pltpu


def _round_up(a: int, b: int) -> int:
    return (a + b - 1) // b * b


def _cdiv(a: int, b: int) -> int:
    return (a + b - 1) // b


def _sublane_multiple(dtype) -> int:
    """Second-minor tiling multiple: 8 for 32-bit, 16 for 16-bit, 32 for 8-bit."""
    bits = jnp.dtype(dtype).itemsize * 8
    return max(8, 256 // bits)


def _vmem_budget_bytes() -> int:
    """Per-core VMEM budget with ~25% headroom, derived from the hardware."""
    phys = 64 * 1024 * 1024  # conservative default (v7x per-TC VMEM)
    try:
        info = pltpu.get_tpu_info()
        phys = int(getattr(info, "vmem_capacity_bytes", phys)) or phys
    except Exception:
        pass
    return max(24 * 1024 * 1024, (phys * 3) // 4)


def _pick_tm(m: int, tm_max: int, sub: int) -> int:
    """Largest M tile (multiple of `sub`) whose padded-row waste is <= 25%."""
    tm_max = max(sub, min(tm_max, _round_up(m, sub)))
    cands = []
    t = tm_max
    while True:
        t = max(sub, (t // sub) * sub)
        if not cands or t != cands[-1]:
            cands.append(t)
        if t == sub:
            break
        t //= 2
    best, best_waste = cands[0], _round_up(m, cands[0]) - m
    for t in cands:  # largest -> smallest
        waste = _round_up(m, t) - m
        if waste * 4 <= m:
            return t
        if waste < best_waste:
            best, best_waste = t, waste
    return best


def _fit_tiles_to_vmem(tm, tn, tk, in_bytes, out_bytes, budget, sub):
    """Shrink (tk, then tn, then tm) until double-buffered tiles fit the budget."""

    def footprint(tm_, tn_, tk_):
        # 2x double-buffered x & w tiles + 2x out tile + f32 accumulator.
        return (2 * (tm_ * tk_ + tk_ * tn_) * in_bytes
                + 2 * tm_ * tn_ * out_bytes
                + tm_ * tn_ * 4)

    while footprint(tm, tn, tk) > budget:
        if tk > 512:
            tk = _round_up(tk // 2, 128)
        elif tn > 256:
            tn = _round_up(tn // 2, 128)
        elif tm > sub:
            tm = max(sub, _round_up(tm // 2, sub))
        elif tk > 128:
            tk = _round_up(tk // 2, 128)
        elif tn > 128:
            tn = _round_up(tn // 2, 128)
        else:
            break
    return tm, tn, tk


def _linear_kernel(x_ref, w_ref, o_ref, acc_ref, *, k_total, tk, mask_k):
    # x_ref: (TM, TK) activations, w_ref: (TK, TN) weight^T, o_ref: (TM, TN).
    kk = pl.program_id(2)

    @pl.when(kk == 0)
    def _():
        acc_ref[...] = jnp.zeros_like(acc_ref)

    x = x_ref[...]
    w = w_ref[...]
    if mask_k:
        # Zero the K tail on BOTH operands: out-of-bounds reads are
        # unspecified, and 0 * garbage (e.g. NaN) would poison the accumulator.
        col = kk * tk + lax.broadcasted_iota(jnp.int32, x.shape, 1)
        x = jnp.where(col < k_total, x, jnp.zeros_like(x))
        row = kk * tk + lax.broadcasted_iota(jnp.int32, w.shape, 0)
        w = jnp.where(row < k_total, w, jnp.zeros_like(w))

    acc_ref[...] += jnp.dot(x, w, preferred_element_type=jnp.float32)

    @pl.when(kk == pl.num_programs(2) - 1)
    def _():
        o_ref[...] = acc_ref[...].astype(o_ref.dtype)


def linear_transform(x, weight, *, tm=512, tn=512, tk=1024):
    """y = x @ weight.T with weight laid out (output_dim, input_dim) like nn.Linear."""
    *lead, d_in = x.shape
    d_out, wk = weight.shape
    assert wk == d_in, "weight must be (output_dim, input_dim)"

    x2d = x.reshape(-1, d_in)            # (M, K)
    w_kn = jnp.swapaxes(weight, 0, 1)    # one-time (K, N) materialization
    m, k, n = x2d.shape[0], d_in, d_out

    sub = _sublane_multiple(x.dtype)
    tn = min(tn, _round_up(n, 128))
    tk = min(tk, _round_up(k, 128))
    tm = _pick_tm(m, tm, sub)

    in_bytes = jnp.dtype(x.dtype).itemsize
    out_bytes = in_bytes
    budget = _vmem_budget_bytes()
    tm, tn, tk = _fit_tiles_to_vmem(tm, tn, tk, in_bytes, out_bytes, budget, sub)

    # Megacore guard (v7x has 2 TensorCores): make sure at least one of the two
    # "parallel" grid axes exposes >= 2 blocks when the problem allows it.
    if _cdiv(m, tm) == 1 and _cdiv(n, tn) == 1:
        if n > 128:
            tn = _round_up(_cdiv(n, 2), 128)
        elif m > sub:
            tm = max(sub, _round_up(_cdiv(m, 2), sub))

    grid = (_cdiv(m, tm), _cdiv(n, tn), _cdiv(k, tk))
    mask_k = (k % tk) != 0

    kernel = functools.partial(_linear_kernel, k_total=k, tk=tk, mask_k=mask_k)

    cost = pl.CostEstimate(
        flops=2 * m * k * n,
        transcendentals=0,
        # Include blocking re-fetch factors: x re-read per N block, w per M block.
        bytes_accessed=(m * k * grid[1] + k * n * grid[0] + m * n) * in_bytes,
    )

    out2d = pl.pallas_call(
        kernel,
        out_shape=jax.ShapeDtypeStruct((m, n), x.dtype),
        grid_spec=pltpu.PrefetchScalarGridSpec(
            num_scalar_prefetch=0,
            grid=grid,
            in_specs=[
                pl.BlockSpec((tm, tk), lambda i, j, kk: (i, kk)),   # x   (M, K)
                pl.BlockSpec((tk, tn), lambda i, j, kk: (kk, j)),   # W^T (K, N)
            ],
            out_specs=pl.BlockSpec((tm, tn), lambda i, j, kk: (i, j)),
            scratch_shapes=[pltpu.VMEM((tm, tn), jnp.float32)],
        ),
        compiler_params=pltpu.CompilerParams(
            dimension_semantics=("parallel", "parallel", "arbitrary"),
            vmem_limit_bytes=int(budget),
        ),
        cost_estimate=cost,
    )(x2d, w_kn)

    return out2d.reshape(*lead, d_out)


if __name__ == "__main__":
    key = jax.random.PRNGKey(0)
    kx, kw, kx2 = jax.random.split(key, 3)

    # Shapes consistent with LinearTransform.forward: (B, T, input_dim)
    B, T, D_IN, D_OUT = 2, 8, 32, 64
    x = jax.random.normal(kx, (B, T, D_IN), dtype=jnp.float32)
    # nn.Linear(input_dim, output_dim, bias=False).weight -> (D_OUT, D_IN)
    weight = jax.random.normal(kw, (D_OUT, D_IN), dtype=jnp.float32) * 0.05

    y = jax.block_until_ready(linear_transform(x, weight))
    y_ref = jnp.einsum("btd,od->bto", x, weight)
    assert y.shape == (B, T, D_OUT)
    assert jnp.allclose(y, y_ref, atol=1e-5, rtol=1e-5)

    # Ragged leading dims (M not a multiple of the row tile) to exercise the
    # masked-K / partial-block output path with no host-side padding.
    x2 = jax.random.normal(kx2, (3, 5, D_IN), dtype=jnp.float32)
    y2 = jax.block_until_ready(linear_transform(x2, weight))
    y2_ref = jnp.einsum("btd,od->bto", x2, weight)
    assert y2.shape == (3, 5, D_OUT)
    assert jnp.allclose(y2, y2_ref, atol=1e-5, rtol=1e-5)

    print("KERNEL_OK")
</pallas_src>

<mosaic_0001>
module attributes {stable_mosaic.version = 11 : i64} {
  func.func @_linear_kernel(%arg0: i32, %arg1: i32, %arg2: i32, %arg3: memref<8x128xf32, #tpu.memory_space<vmem>>, %arg4: memref<128x128xf32, #tpu.memory_space<vmem>>, %arg5: memref<8x128xf32, #tpu.memory_space<vmem>>, %arg6: memref<8x128xf32, #tpu.memory_space<vmem>>) attributes {dimension_semantics = [#tpu.dimension_semantics<parallel>, #tpu.dimension_semantics<parallel>, #tpu.dimension_semantics<arbitrary>], iteration_bounds = array<i64: 2, 1, 1>, scalar_prefetch = 0 : i64, scratch_operands = 1 : i64, tpu.core_type = #tpu.core_type<tc>, window_params = [{transform_indices = @transform_0, window_bounds = array<i64: 8, 128>}, {transform_indices = @transform_1, window_bounds = array<i64: 128, 128>}, {transform_indices = @transform_2, window_bounds = array<i64: 8, 128>}]} {
    %c0_i32 = arith.constant 0 : i32
    %0 = arith.cmpi eq, %arg2, %c0_i32 : i32
    %1 = arith.extui %0 : i1 to i32
    %c0_i32_0 = arith.constant 0 : i32
    %2 = arith.cmpi ne, %1, %c0_i32_0 : i32
    scf.if %2 {
      %cst_14 = arith.constant 0.000000e+00 : f32
      %28 = vector.broadcast %cst_14 : f32 to vector<8x128xf32>
      %c0_15 = arith.constant 0 : index
      %c0_16 = arith.constant 0 : index
      %29 = vector.load %arg6[%c0_15, %c0_16] : memref<8x128xf32, #tpu.memory_space<vmem>>, vector<8x128xf32>
      tpu.vector_store %arg6[%c0_15, %c0_16], %28 {strides = array<i32>} : memref<8x128xf32, #tpu.memory_space<vmem>>, vector<8x128xf32>,
    } else {
    }
    %c0 = arith.constant 0 : index
    %c0_1 = arith.constant 0 : index
    %3 = vector.load %arg3[%c0, %c0_1] : memref<8x128xf32, #tpu.memory_space<vmem>>, vector<8x128xf32>
    %c0_2 = arith.constant 0 : index
    %c0_3 = arith.constant 0 : index
    %4 = vector.load %arg4[%c0_2, %c0_3] : memref<128x128xf32, #tpu.memory_space<vmem>>, vector<128x128xf32>
    %c128_i32 = arith.constant 128 : i32
    %5 = arith.muli %arg2, %c128_i32 : i32
    %6 = tpu.iota {dimensions = array<i32: 1>} : vector<8x128xi32>
    %7 = vector.broadcast %5 : i32 to vector<8x128xi32>
    %8 = arith.addi %7, %6 : vector<8x128xi32>
    %c32_i32 = arith.constant 32 : i32
    %9 = vector.broadcast %c32_i32 : i32 to vector<8x128xi32>
    %10 = arith.cmpi slt, %8, %9 : vector<8x128xi32>
    %cst = arith.constant 0.000000e+00 : f32
    %11 = vector.broadcast %cst : f32 to vector<8x128xf32>
    %12 = arith.select %10, %3, %11 : vector<8x128xi1>, vector<8x128xf32>
    %c128_i32_4 = arith.constant 128 : i32
    %13 = arith.muli %arg2, %c128_i32_4 : i32
    %14 = tpu.iota {dimensions = array<i32: 0>} : vector<128x128xi32>
    %15 = vector.broadcast %13 : i32 to vector<128x128xi32>
    %16 = arith.addi %15, %14 : vector<128x128xi32>
    %c32_i32_5 = arith.constant 32 : i32
    %17 = vector.broadcast %c32_i32_5 : i32 to vector<128x128xi32>
    %18 = arith.cmpi slt, %16, %17 : vector<128x128xi32>
    %cst_6 = arith.constant 0.000000e+00 : f32
    %19 = vector.broadcast %cst_6 : f32 to vector<128x128xf32>
    %20 = arith.select %18, %4, %19 : vector<128x128xi1>, vector<128x128xf32>
    %c0_7 = arith.constant 0 : index
    %c0_8 = arith.constant 0 : index
    %21 = vector.load %arg6[%c0_7, %c0_8] : memref<8x128xf32, #tpu.memory_space<vmem>>, vector<8x128xf32>
    %cst_9 = arith.constant dense<0.000000e+00> : vector<8x128xf32>
    %22 = tpu.matmul %12, %20, %cst_9 {dimension_numbers = #tpu.dot_dimension_numbers<[1], [0], [0], [1], [0, 0, 1, 1], [], []>} : vector<8x128xf32>, vector<128x128xf32>, vector<8x128xf32> -> vector<8x128xf32>
    %23 = arith.addf %21, %22 : vector<8x128xf32>
    %c0_10 = arith.constant 0 : index
    %c0_11 = arith.constant 0 : index
    %24 = vector.load %arg6[%c0_10, %c0_11] : memref<8x128xf32, #tpu.memory_space<vmem>>, vector<8x128xf32>
    tpu.vector_store %arg6[%c0_10, %c0_11], %23 {strides = array<i32>} : memref<8x128xf32, #tpu.memory_space<vmem>>, vector<8x128xf32>,
    %c0_i32_12 = arith.constant 0 : i32
    %25 = arith.cmpi eq, %arg2, %c0_i32_12 : i32
    %26 = arith.extui %25 : i1 to i32
    %c0_i32_13 = arith.constant 0 : i32
    %27 = arith.cmpi ne, %26, %c0_i32_13 : i32
    scf.if %27 {
      %c0_14 = arith.constant 0 : index
      %c0_15 = arith.constant 0 : index
      %28 = vector.load %arg6[%c0_14, %c0_15] : memref<8x128xf32, #tpu.memory_space<vmem>>, vector<8x128xf32>
      %c0_16 = arith.constant 0 : index
      %c0_17 = arith.constant 0 : index
      %29 = vector.load %arg5[%c0_16, %c0_17] : memref<8x128xf32, #tpu.memory_space<vmem>>, vector<8x128xf32>
      tpu.vector_store %arg5[%c0_16, %c0_17], %28 {strides = array<i32>} : memref<8x128xf32, #tpu.memory_space<vmem>>, vector<8x128xf32>,
    } else {
    }
    return
  }
  func.func @transform_0(%arg0: i32, %arg1: i32, %arg2: i32) -> (i32, i32) {
    %c0_i32 = arith.constant 0 : i32
    return %arg0, %arg2 : i32, i32
  }
  func.func @transform_1(%arg0: i32, %arg1: i32, %arg2: i32) -> (i32, i32) {
    %c0_i32 = arith.constant 0 : i32
    return %arg2, %arg1 : i32, i32
  }
  func.func @transform_2(%arg0: i32, %arg1: i32, %arg2: i32) -> (i32, i32) {
    %c0_i32 = arith.constant 0 : i32
    return %arg0, %arg1 : i32, i32
  }
}

</mosaic_0001>

<llo_original>
// kernel: tpu_custom_call.1
$region0: #{tpu_custom_call.1}
  #allocation0 [shape = 'u32[]', space=smem, size = 0x4, offset = 0x4, fixed_abs, tag = 'smem constant byte address 0x4 - core index']
  #allocation1 [shape = 'u32[72,128]{1,0:T(1,128)}', space=vmem, size = 0x9000, scoped, tag = 'internal scratch']
  #allocation2 [shape = 'f32[8,128]{1,0:T(8,128)}', space=vmem, size = 0x1000, scoped, tag = 'scratch operand']
  %s0 = inlined_call_operand.hbm [shape: f32[16,32], index: 0, kind: input, shape index: {}]
  %s1 = inlined_call_operand.hbm [shape: f32[32,64], index: 1, kind: input, shape index: {}]
  %s2 = inlined_call_operand.hbm [shape: f32[16,64], index: 2, kind: output, shape index: {}]
  %s3 = sld [smem:[#allocation0]]
  $region57: #{tpu_custom_call.1} parent=0
    _
  %s5 = ssub.s32 1, %s3
  %s6 = scalar_select 0, %s5, %s3
  $region1: #{tpu_custom_call.1} parent=0
    #allocation3 [shape = 'u8[8192]{0}', space=vmem, size = 0x2000, scoped, tag = 'input window, operand 0']
    #allocation4 [shape = 's32[2]{0}', space=sflag, size = 0x8, scoped, tag = 'scoped memory for tpu_custom_call.1']
    #allocation5 [shape = 's32[2]{0}', space=sflag, size = 0x8, scoped, tag = 'scoped memory for tpu_custom_call.1']
    #allocation6 [shape = 'u8[65536]{0}', space=vmem, size = 0x10000, scoped, tag = 'input window, operand 1, single buffered']
    #allocation7 [shape = 's32[1]{0}', space=sflag, size = 0x4, scoped, tag = 'scoped memory for tpu_custom_call.1']
    #allocation8 [shape = 'u8[8192]{0}', space=vmem, size = 0x2000, scoped, tag = 'output window, operand 0']
    %7 = vsyncpa [#allocation4], 0
    %s8 = scalar_lea.sflag [#allocation4], 1
    %9 = vsyncpa %s8, 0
    %10 = vsyncpa [#allocation7], 0
    %11 = vsyncpa [#allocation5], 0
    %s12 = scalar_lea.sflag [#allocation5], 1
    %13 = vsyncpa %s12, 0
    loop: start=0, step=1, limit=4
    $region2: #{tpu_custom_call.1} parent=1 // loop_pre_header
      _
    $region3: #{tpu_custom_call.1} parent=1 // loop_header
      %s15 = sphi 0, %s19
      %p16 = scmp.ge.s32.totalorder %s15, 4
      %s22 = sphi 0, %s41
      %s23 = sphi 0, %s37
      %s24 = sphi 0, %s33
      %s25 = sphi 0, %s22
      %s26 = sphi 0, %s23
      %s27 = sphi 0, %s24
      %s28 = sphi 0, %s25
      %s29 = sphi 0, %s26
      %s30 = sphi 0, %s27
      %s46 = sphi 0, %s48
      %s49 = sphi 0, %s46
      %s50 = sphi 0, %s49
      %s66 = sphi 0, %s50
      %s74 = sphi 0, %s76
      %s77 = sphi 0, %s74
      %s78 = sphi 0, %s77
      %s94 = sphi 0, %s78
      %s102 = sphi 0, %s104
      %s105 = sphi 0, %s102
      %s106 = sphi 0, %s105
      %s122 = sphi 0, %s106
    $region4: #{tpu_custom_call.1} parent=1 // loop_header_branch
      %18 = sbr.rel (%p16) target = $region8
    $region5: #{tpu_custom_call.1} parent=1 // loop_body
      %s20 = ssub.s32 %s15, 1
      %s21 = ssub.s32 %s15, 2
      %s31 = sadd.s32 1, %s24
      %p32 = scmp.ge.s32.totalorder %s31, 1
      %s33 = scalar_select %p32, 0, %s31
      %s34 = sadd.s32 1, %s23
      %s35 = scalar_select %p32, %s34, %s23
      %p36 = scmp.ge.s32.totalorder %s35, 1
      %s37 = scalar_select %p36, 0, %s35
      %s38 = sadd.s32 1, %s22
      %s39 = scalar_select %p36, %s38, %s22
      %p40 = scmp.ge.s32.totalorder %s39, 2
      %s41 = scalar_select %p40, 0, %s39
      %s42 = ssub.s32 %s22, %s41
      %s43 = ssub.s32 %s24, %s33
      %s44 = sor.u32 %s42, %s43
      %p45 = scmp.eq.s32.totalorder %s44, 0
      %s47 = sadd.s32 %s46, 1
      %s48 = scalar_select %p45, %s46, %s47
      %p51 = pneg %p45
      %p52 = scmp.eq.s32.totalorder %s15, 1
      %p53 = por %p51, %p52
      %p54 = scmp.ne.s32.totalorder %s46, %s49
      %p55 = scmp.eq.s32.totalorder %s15, 0
      %p56 = por %p54, %p55
      %p57 = scmp.ne.s32.totalorder %s46, %s49
      %p58 = scmp.eq.s32.totalorder %s20, 1
      %p59 = por %p57, %p58
      %p60 = scmp.ne.s32.totalorder %s49, %s50
      %p61 = scmp.eq.s32.totalorder %s20, 0
      %p62 = por %p60, %p61
      %p63 = scmp.ne.s32.totalorder %s49, %s50
      %p64 = scmp.eq.s32.totalorder %s21, 1
      %p65 = por %p63, %p64
      %p67 = scmp.ne.s32.totalorder %s50, %s66
      %p68 = scmp.eq.s32.totalorder %s21, 0
      %p69 = por %p67, %p68
      %s70 = ssub.s32 %s24, %s33
      %s71 = ssub.s32 %s23, %s37
      %s72 = sor.u32 %s70, %s71
      %p73 = scmp.eq.s32.totalorder %s72, 0
      %s75 = sadd.s32 %s74, 1
      %s76 = scalar_select %p73, %s74, %s75
      %p79 = pneg %p73
      %p80 = scmp.eq.s32.totalorder %s15, 1
      %p81 = por %p79, %p80
      %p82 = scmp.ne.s32.totalorder %s74, %s77
      %p83 = scmp.eq.s32.totalorder %s15, 0
      %p84 = por %p82, %p83
      %p85 = scmp.ne.s32.totalorder %s74, %s77
      %p86 = scmp.eq.s32.totalorder %s20, 1
      %p87 = por %p85, %p86
      %p88 = scmp.ne.s32.totalorder %s77, %s78
      %p89 = scmp.eq.s32.totalorder %s20, 0
      %p90 = por %p88, %p89
      %p91 = scmp.ne.s32.totalorder %s77, %s78
      %p92 = scmp.eq.s32.totalorder %s21, 1
      %p93 = por %p91, %p92
      %p95 = scmp.ne.s32.totalorder %s78, %s94
      %p96 = scmp.eq.s32.totalorder %s21, 0
      %p97 = por %p95, %p96
      %s98 = ssub.s32 %s22, %s41
      %s99 = ssub.s32 %s23, %s37
      %s100 = sor.u32 %s98, %s99
      %p101 = scmp.eq.s32.totalorder %s100, 0
      %s103 = sadd.s32 %s102, 1
      %s104 = scalar_select %p101, %s102, %s103
      %p107 = pneg %p101
      %p108 = scmp.eq.s32.totalorder %s15, 1
      %p109 = por %p107, %p108
      %p110 = scmp.ne.s32.totalorder %s102, %s105
      %p111 = scmp.eq.s32.totalorder %s15, 0
      %p112 = por %p110, %p111
      %p113 = scmp.ne.s32.totalorder %s102, %s105
      %p114 = scmp.eq.s32.totalorder %s20, 1
      %p115 = por %p113, %p114
      %p116 = scmp.ne.s32.totalorder %s105, %s106
      %p117 = scmp.eq.s32.totalorder %s20, 0
      %p118 = por %p116, %p117
      %p119 = scmp.ne.s32.totalorder %s105, %s106
      %p120 = scmp.eq.s32.totalorder %s21, 1
      %p121 = por %p119, %p120
      %p123 = scmp.ne.s32.totalorder %s106, %s122
      %p124 = scmp.eq.s32.totalorder %s21, 0
      %p125 = por %p123, %p124
      %p126 = scmp.le.s32.totalorder 1, %s15
      %p127 = scmp.lt.s32.totalorder %s15, 3
      %p128 = pnand %p126, %p127
      %p129 = pneg %p128
      // Predicated region
      $region9: #{tpu_custom_call.1} parent=5 // pred_check
        _
      $region10: #{tpu_custom_call.1} parent=5 // pred_check_branch
        %131 = sbr.rel (%p128) target = $region12
      $region11: #{tpu_custom_call.1} parent=5 // pred_region
        %s132 = ssub.s32 %s15, 1
        // Predicated region
        $region13: #{tpu_custom_call.1} parent=11 // pred_check
          %p133 = pneg %p90
        $region14: #{tpu_custom_call.1} parent=11 // pred_check_branch
          %135 = sbr.rel (%p133) target = $region16
        $region15: #{tpu_custom_call.1} parent=11 // pred_region
          %s136 = smul.u32 16, %s27
          %s137 = ssub.s32 4, %s136
          %s138 = smul.u32 8, %s137
          %s139 = ssub.s32 128, %s138
          %s140 = sshll.u32 %s139, 4
          %141 = vsyncadd [#allocation7], %s140
          %p142 = scmp.ne.s32.totalorder 0, %s138
          %s143 = sadd.s32 %s26, %s136
          %s144 = smul.addr %s143, 8
          %s145 = scalar_lea.hbm %s1, %s144
          %s146 = smul.u32 8, %s137
          %s147 = sshll.u32 %s145, 4
          %s148 = int_to_ptr.hbm [resolvable:$true] %s147
          %s149 = sshll.u32 [#allocation6], 4
          %s150 = int_to_ptr.vmem [resolvable:$true] %s149
          %s151 = sshll.u32 %s146, 4
          %155 = dma.hbm_to_vmem [thread:$0]  (%p142), %s148, %s151, %s150, [#allocation7], 128, 128, 8
        $region16: #{tpu_custom_call.1} parent=11 // pred_fallthru
          _
      $region12: #{tpu_custom_call.1} parent=5 // pred_fallthru
        _
      %p156 = scmp.lt.s32.totalorder %s15, 2
      // Predicated region
      $region17: #{tpu_custom_call.1} parent=5 // pred_check
        %p157 = pneg %p156
      $region18: #{tpu_custom_call.1} parent=5 // pred_check_branch
        %159 = sbr.rel (%p157) target = $region20
      $region19: #{tpu_custom_call.1} parent=5 // pred_region
        // Predicated region
        $region21: #{tpu_custom_call.1} parent=19 // pred_check
          %p160 = pneg %p56
        $region22: #{tpu_custom_call.1} parent=19 // pred_check_branch
          %162 = sbr.rel (%p160) target = $region24
        $region23: #{tpu_custom_call.1} parent=19 // pred_region
          %s163 = sand.u32 %s46, 1
          %s164 = scalar_lea.sflag [#allocation4], %s163
          %s165 = sand.u32 %s46, 1
          %s166 = smul.addr %s165, 8
          %s167 = scalar_lea.vmem [#allocation3], %s166
          %169 = vsyncadd %s164, 0
          %s170 = sadd.s32 %s24, %s22
          %s171 = smul.addr %s170, 8
          %s172 = scalar_lea.hbm %s0, %s171
          %s174 = sshll.u32 %s172, 4
          %s175 = int_to_ptr.hbm [resolvable:$true] %s174
          %s176 = sshll.u32 %s167, 4
          %s177 = int_to_ptr.vmem [resolvable:$true] %s176
          %179 = dma.hbm_to_vmem [thread:$0]  %s175, 128, %s177, %s164
        $region24: #{tpu_custom_call.1} parent=19 // pred_fallthru
          _
      $region20: #{tpu_custom_call.1} parent=5 // pred_fallthru
        _
      %p180 = scmp.le.s32.totalorder 1, %s15
      %p181 = scmp.lt.s32.totalorder %s15, 3
      %p182 = pnand %p180, %p181
      %p183 = pneg %p182
      // Predicated region
      $region25: #{tpu_custom_call.1} parent=5 // pred_check
        _
      $region26: #{tpu_custom_call.1} parent=5 // pred_check_branch
        %185 = sbr.rel (%p182) target = $region28
      $region27: #{tpu_custom_call.1} parent=5 // pred_region
        %s186 = ssub.s32 %s15, 1
        %s187 = sand.u32 %s49, 1
        %s188 = scalar_lea.sflag [#allocation4], %s187
        %s189 = sand.u32 %s49, 1
        %s190 = smul.addr %s189, 8
        %s191 = scalar_lea.vmem [#allocation3], %s190
        // Predicated region
        $region29: #{tpu_custom_call.1} parent=27 // pred_check
          %p192 = pneg %p62
        $region30: #{tpu_custom_call.1} parent=27 // pred_check_branch
          %194 = sbr.rel (%p192) target = $region32
        $region31: #{tpu_custom_call.1} parent=27 // pred_region
          %196 = dma.done %s188, 128
        $region32: #{tpu_custom_call.1} parent=27 // pred_fallthru
          _
        // Predicated region
        $region33: #{tpu_custom_call.1} parent=27 // pred_check
          %p197 = pneg %p90
        $region34: #{tpu_custom_call.1} parent=27 // pred_check_branch
          %199 = sbr.rel (%p197) target = $region36
        $region35: #{tpu_custom_call.1} parent=27 // pred_region
          %201 = dma.done [#allocation7], 2048
        $region36: #{tpu_custom_call.1} parent=27 // pred_fallthru
          _
        %s202 = sand.u32 %s49, 1
        %s203 = scalar_lea.sflag [#allocation4], %s202
        %s204 = sand.u32 %s49, 1
        %s205 = smul.addr %s204, 8
        %s206 = scalar_lea.vmem [#allocation3], %s205
        %p207 = pneg %p62
        %p208 = pneg %p59
        %p209 = pneg %p90
        %p210 = pneg %p87
        %p211 = pneg %p118
        %p212 = pneg %p115
        %s213 = sand.u32 %s105, 1
        %s214 = scalar_lea.sflag [#allocation5], %s213
        %s215 = sand.u32 %s105, 1
        %s216 = smul.addr %s215, 8
        %s217 = scalar_lea.vmem [#allocation8], %s216
        %s218 = smul.u32 16, %s27
        %s219 = ssub.s32 4, %s218
        %s220 = smul.u32 8, %s219
        %p221 = scmp.eq.s32.totalorder %s27, 0
        // Predicated region
        $region37: #{tpu_custom_call.1} parent=27 // pred_check
          %p222 = pneg %p221
        $region38: #{tpu_custom_call.1} parent=27 // pred_check_branch
          %224 = sbr.rel (%p222) target = $region40
        $region39: #{tpu_custom_call.1} parent=27 // pred_region
          %225 = vst [vmem:[#allocation2] sm:$0xff] 0.0
        $region40: #{tpu_custom_call.1} parent=27 // pred_fallthru
          _
        %v226 = vld [vmem:[%s191] sm:$0xff]
        %v227 = vld [vmem:[#allocation6] sm:$0xff]
        %v228 = vld [vmem:[#allocation6 + $0x8] sm:$0xff]
        %v229 = vld [vmem:[#allocation6 + $0x10] sm:$0xff]
        %v230 = vld [vmem:[#allocation6 + $0x18] sm:$0xff]
        %v231 = vld [vmem:[#allocation6 + $0x20] sm:$0xff]
        %v232 = vld [vmem:[#allocation6 + $0x28] sm:$0xff]
        %v233 = vld [vmem:[#allocation6 + $0x30] sm:$0xff]
        %v234 = vld [vmem:[#allocation6 + $0x38] sm:$0xff]
        %v235 = vld [vmem:[#allocation6 + $0x40] sm:$0xff]
        %v236 = vld [vmem:[#allocation6 + $0x48] sm:$0xff]
        %v237 = vld [vmem:[#allocation6 + $0x50] sm:$0xff]
        %v238 = vld [vmem:[#allocation6 + $0x58] sm:$0xff]
        %v239 = vld [vmem:[#allocation6 + $0x60] sm:$0xff]
        %v240 = vld [vmem:[#allocation6 + $0x68] sm:$0xff]
        %v241 = vld [vmem:[#allocation6 + $0x70] sm:$0xff]
        %v242 = vld [vmem:[#allocation6 + $0x78] sm:$0xff]
        %s243 = smul.u32 %s27, 128
        %v244 = vlaneseq
        %v245 = vand.u32 %v244, 127
        %v246 = vstv %s243
        %v247 = vadd.s32 %v246, %v245
        %vm248 = vcmp.lt.s32.totalorder %v247, 32
        %v249 = vsel %vm248, %v226, 0.0
        %v250 = vlaneseq
        %v251 = vshrl.u32 %v250, 7
        %v252 = vadd.s32 %v251, 8
        %v253 = vadd.s32 %v251, 16
        %v254 = vadd.s32 %v251, 24
        %v255 = vadd.s32 %v251, 32
        %v256 = vadd.s32 %v251, 40
        %v257 = vadd.s32 %v251, 48
        %v258 = vadd.s32 %v251, 56
        %v259 = vadd.s32 %v251, 64
        %v260 = vadd.s32 %v251, 72
        %v261 = vadd.s32 %v251, 80
        %v262 = vadd.s32 %v251, 88
        %v263 = vadd.s32 %v251, 96
        %v264 = vadd.s32 %v251, 104
        %v265 = vadd.s32 %v251, 112
        %v266 = vadd.s32 %v251, 120
        %v267 = vadd.s32 %v246, %v251
        %v268 = vadd.s32 %v246, %v252
        %v269 = vadd.s32 %v246, %v253
        %v270 = vadd.s32 %v246, %v254
        %v271 = vadd.s32 %v246, %v255
        %v272 = vadd.s32 %v246, %v256
        %v273 = vadd.s32 %v246, %v257
        %v274 = vadd.s32 %v246, %v258
        %v275 = vadd.s32 %v246, %v259
        %v276 = vadd.s32 %v246, %v260
        %v277 = vadd.s32 %v246, %v261
        %v278 = vadd.s32 %v246, %v262
        %v279 = vadd.s32 %v246, %v263
        %v280 = vadd.s32 %v246, %v264
        %v281 = vadd.s32 %v246, %v265
        %v282 = vadd.s32 %v246, %v266
        %vm283 = vcmp.lt.s32.totalorder %v267, 32
        %vm284 = vcmp.lt.s32.totalorder %v268, 32
        %vm285 = vcmp.lt.s32.totalorder %v269, 32
        %vm286 = vcmp.lt.s32.totalorder %v270, 32
        %vm287 = vcmp.lt.s32.totalorder %v271, 32
        %vm288 = vcmp.lt.s32.totalorder %v272, 32
        %vm289 = vcmp.lt.s32.totalorder %v273, 32
        %vm290 = vcmp.lt.s32.totalorder %v274, 32
        %vm291 = vcmp.lt.s32.totalorder %v275, 32
        %vm292 = vcmp.lt.s32.totalorder %v276, 32
        %vm293 = vcmp.lt.s32.totalorder %v277, 32
        %vm294 = vcmp.lt.s32.totalorder %v278, 32
        %vm295 = vcmp.lt.s32.totalorder %v279, 32
        %vm296 = vcmp.lt.s32.totalorder %v280, 32
        %vm297 = vcmp.lt.s32.totalorder %v281, 32
        %vm298 = vcmp.lt.s32.totalorder %v282, 32
        %v299 = vsel %vm283, %v227, 0.0
        %v300 = vsel %vm284, %v228, 0.0
        %v301 = vsel %vm285, %v229, 0.0
        %v302 = vsel %vm286, %v230, 0.0
        %v303 = vsel %vm287, %v231, 0.0
        %v304 = vsel %vm288, %v232, 0.0
        %v305 = vsel %vm289, %v233, 0.0
        %v306 = vsel %vm290, %v234, 0.0
        %v307 = vsel %vm291, %v235, 0.0
        %v308 = vsel %vm292, %v236, 0.0
        %v309 = vsel %vm293, %v237, 0.0
        %v310 = vsel %vm294, %v238, 0.0
        %v311 = vsel %vm295, %v239, 0.0
        %v312 = vsel %vm296, %v240, 0.0
        %v313 = vsel %vm297, %v241, 0.0
        %v314 = vsel %vm298, %v242, 0.0
        %v315 = vld [vmem:[#allocation2] sm:$0xff]
        %316 = vmatpush.msra.mxu0 %v314
        %317 = vmatpush.msra.mxu0 %v313
        %318 = vmatpush.msra.mxu0 %v312
        %319 = vmatpush.msra.mxu0 %v311
        %320 = vmatpush.msra.mxu0 %v310
        %321 = vmatpush.msra.mxu0 %v309
        %322 = vmatpush.msra.mxu0 %v308
        %323 = vmatpush.msra.mxu0 %v307
        %324 = vmatpush.msra.mxu0 %v306
        %325 = vmatpush.msra.mxu0 %v305
        %326 = vmatpush.msra.mxu0 %v304
        %327 = vmatpush.msra.mxu0 %v303
        %328 = vmatpush.msra.mxu0 %v302
        %329 = vmatpush.msra.mxu0 %v301
        %330 = vmatpush.msra.mxu0 %v300
        %331 = vmatpush.msra.mxu0 %v299
        %332 = vmatmul.f32.gmra.mxu0 %v249
        %v333 = vpop.f32.mrf.mxu0
        %v334 = vadd.f32 0.0, %v333
        %335 = vdwg.mxu0
        %v336 = vadd.f32 %v315, %v334
        %337 = vst [vmem:[#allocation2] sm:$0xff] %v336
        // Predicated region
        $region41: #{tpu_custom_call.1} parent=27 // pred_check
          %p338 = pneg %p221
        $region42: #{tpu_custom_call.1} parent=27 // pred_check_branch
          %340 = sbr.rel (%p338) target = $region44
        $region43: #{tpu_custom_call.1} parent=27 // pred_region
          %v341 = vld [vmem:[#allocation2] sm:$0xff]
          %342 = vst [vmem:[%s217] sm:$0xff] %v341
        $region44: #{tpu_custom_call.1} parent=27 // pred_fallthru
          _
        %s343 = sand.u32 %s105, 1
        %s344 = scalar_lea.sflag [#allocation5], %s343
        %s345 = sand.u32 %s105, 1
        %s346 = smul.addr %s345, 8
        %s347 = scalar_lea.vmem [#allocation8], %s346
        // Predicated region
        $region45: #{tpu_custom_call.1} parent=27 // pred_check
          %p348 = pneg %p115
        $region46: #{tpu_custom_call.1} parent=27 // pred_check_branch
          %350 = sbr.rel (%p348) target = $region48
        $region47: #{tpu_custom_call.1} parent=27 // pred_region
          %352 = vsyncadd %s344, 0
          %s353 = sadd.s32 %s26, %s25
          %s354 = smul.addr %s353, 8
          %s355 = scalar_lea.hbm %s2, %s354
          %s357 = sshll.u32 %s347, 4
          %s358 = int_to_ptr.vmem [resolvable:$true] %s357
          %s359 = sshll.u32 %s355, 4
          %s360 = int_to_ptr.hbm [resolvable:$true] %s359
          %362 = dma.vmem_to_hbm [thread:$0]  %s358, 128, %s360, %s344
        $region48: #{tpu_custom_call.1} parent=27 // pred_fallthru
          _
      $region28: #{tpu_custom_call.1} parent=5 // pred_fallthru
        _
      %p363 = scmp.le.s32.totalorder 2, %s15
      // Predicated region
      $region49: #{tpu_custom_call.1} parent=5 // pred_check
        %p364 = pneg %p363
      $region50: #{tpu_custom_call.1} parent=5 // pred_check_branch
        %366 = sbr.rel (%p364) target = $region52
      $region51: #{tpu_custom_call.1} parent=5 // pred_region
        %s367 = ssub.s32 %s15, 2
        // Predicated region
        $region53: #{tpu_custom_call.1} parent=51 // pred_check
          %p368 = pneg %p121
        $region54: #{tpu_custom_call.1} parent=51 // pred_check_branch
          %370 = sbr.rel (%p368) target = $region56
        $region55: #{tpu_custom_call.1} parent=51 // pred_region
          %s371 = sand.u32 %s106, 1
          %s372 = scalar_lea.sflag [#allocation5], %s371
          %s373 = sand.u32 %s106, 1
          %s374 = smul.addr %s373, 8
          %s375 = scalar_lea.vmem [#allocation8], %s374
          %377 = dma.done %s372, 128
        $region56: #{tpu_custom_call.1} parent=51 // pred_fallthru
          _
      $region52: #{tpu_custom_call.1} parent=5 // pred_fallthru
        _
    $region6: #{tpu_custom_call.1} parent=1 // loop_footer
      %s19 = sadd.s32 1, %s15
    $region7: #{tpu_custom_call.1} parent=1 // loop_footer_branch
      %14 = sbr.rel target = $region3
    $region8: #{tpu_custom_call.1} parent=1 // loop_exit
      _
    %378 = vsyncpa [#allocation4], 1
    %s379 = scalar_lea.sflag [#allocation4], 1
    %380 = vsyncpa %s379, 1
    %381 = vsyncpa [#allocation7], 1
    %382 = vsyncpa [#allocation5], 1
    %s383 = scalar_lea.sflag [#allocation5], 1
    %384 = vsyncpa %s383, 1

</llo_original>
